<compile_context>
chip_gen: v6e
topology: v6e:2x2x1
jax: 0.10.0
libtpu: 0.0.40
codegen_flags: <defaults>
</compile_context>

<pallas_src>
import functools

import jax
import jax.numpy as jnp
import numpy as np
from jax.experimental import pallas as pl
from jax.experimental.pallas import tpu as pltpu

_MIB = 1024 * 1024


# ---------------------------------------------------------------------------
# Generation-aware VMEM budgets.
# ---------------------------------------------------------------------------
def _vmem_capacity_bytes():
    """Physical VMEM per TensorCore (128 MiB on v5e/v6e, 64 MiB on v7x)."""
    try:
        cap = int(getattr(pltpu.get_tpu_info(), "vmem_capacity_bytes", 0))
        if cap > 0:
            return cap
    except Exception:
        pass
    return 64 * _MIB  # conservative (v7x-sized) default


def _vmem_budgets():
    cap = _vmem_capacity_bytes()
    # Leave ~16 MiB headroom for compiler-internal scratch / body temporaries;
    # never request more than 96 MiB even on 128-MiB parts.
    limit = min(96 * _MIB, max(cap - 16 * _MIB, 16 * _MIB))
    # Budget for the pipelined x blocks themselves (in + out, double-buffered),
    # leaving room for weights and the excite temporaries.
    block_budget = max(limit - 8 * _MIB, 8 * _MIB)
    return limit, block_budget


def _choose_tb(B, max_tb):
    """Largest divisor of B that fits the block budget (avoids padded rows)."""
    max_tb = int(max(1, min(max_tb, B)))
    tb = 1
    for t in range(1, max_tb + 1):
        if B % t == 0:
            tb = t
    return tb


def _choose_tl(L, C, itemsize, block_budget):
    """Largest multiple-of-128 L tile whose in+out double-buffered blocks fit."""
    if L <= 128:
        return int(L)
    max_tl = block_budget // (4 * C * itemsize)
    tl = max((max_tl // 128) * 128, 128)
    return int(min(tl, L))


# ---------------------------------------------------------------------------
# Fused single-pass variant: grid over batch blocks, one (TB, C, L) slab/step.
# ---------------------------------------------------------------------------
def _se1d_fused_kernel(x_ref, w1_ref, b1_ref, w2_ref, b2_ref, o_ref, *, inv_l):
    # Squeeze: f32-accumulated mean over the length (lane) axis.
    y = jnp.sum(x_ref[...], axis=-1, dtype=jnp.float32) * inv_l        # (TB, C)
    # Excite: tiny FC -> ReLU -> FC -> sigmoid (not the bottleneck).
    h = jnp.dot(y, w1_ref[...], preferred_element_type=jnp.float32) + b1_ref[...]
    h = jnp.maximum(h, 0.0)                                            # (TB, H)
    s = jnp.dot(h, w2_ref[...], preferred_element_type=jnp.float32) + b2_ref[...]
    s = jax.nn.sigmoid(s).astype(o_ref.dtype)                          # (TB, C)
    # Scale: re-read x from the VMEM block (no slab-sized value stays live
    # across the MLP -> roughly halves body VMEM/vreg pressure) and broadcast
    # s along L (cheap lane broadcast in NCL layout).
    o_ref[...] = (x_ref[...] * s[:, :, None]).astype(o_ref.dtype)


def _se1d_fused(x, w1, b1, w2, b2, *, tb, vmem_limit):
    B, C, L = x.shape
    H = w1.shape[1]
    kernel = functools.partial(_se1d_fused_kernel, inv_l=1.0 / L)
    return pl.pallas_call(
        kernel,
        out_shape=jax.ShapeDtypeStruct((B, C, L), x.dtype),
        grid=(B // tb,),
        in_specs=[
            pl.BlockSpec((tb, C, L), lambda b: (b, 0, 0)),
            pl.BlockSpec((C, H), lambda b: (0, 0)),
            pl.BlockSpec((1, H), lambda b: (0, 0)),
            pl.BlockSpec((H, C), lambda b: (0, 0)),
            pl.BlockSpec((1, C), lambda b: (0, 0)),
        ],
        out_specs=pl.BlockSpec((tb, C, L), lambda b: (b, 0, 0)),
        compiler_params=pltpu.CompilerParams(
            dimension_semantics=("parallel",),
            vmem_limit_bytes=int(vmem_limit),
        ),
    )(x, w1, b1, w2, b2)


# ---------------------------------------------------------------------------
# Two-pass variant for large per-batch slabs: (1) reduce + MLP, (2) scale.
# ---------------------------------------------------------------------------
def _se1d_reduce_kernel(x_ref, w1_ref, b1_ref, w2_ref, b2_ref, s_ref, acc_ref,
                        *, l_total, tl, need_mask):
    k = pl.program_id(1)
    last = pl.num_programs(1) - 1

    @pl.when(k == 0)
    def _():
        acc_ref[...] = jnp.zeros_like(acc_ref)

    if need_mask:
        # L % tl != 0: only the final tile is partial; mask only there so
        # every other step is a plain (maskless) lane reduction.
        @pl.when(k != last)
        def _():
            acc_ref[...] += jnp.sum(x_ref[...], axis=-1, dtype=jnp.float32)

        @pl.when(k == last)
        def _():
            x = x_ref[...]                                            # (1, C, TL)
            col = k * tl + jax.lax.broadcasted_iota(jnp.int32, x.shape, 2)
            x = jnp.where(col < l_total, x, jnp.zeros_like(x))
            acc_ref[...] += jnp.sum(x, axis=-1, dtype=jnp.float32)
    else:
        # Aligned L: no iota/compare/select on the hot path at all.
        acc_ref[...] += jnp.sum(x_ref[...], axis=-1, dtype=jnp.float32)

    @pl.when(k == last)
    def _():
        y = acc_ref[...] * (1.0 / l_total)                            # true L
        h = jnp.dot(y, w1_ref[...], preferred_element_type=jnp.float32) + b1_ref[...]
        h = jnp.maximum(h, 0.0)
        s = jax.nn.sigmoid(
            jnp.dot(h, w2_ref[...], preferred_element_type=jnp.float32) + b2_ref[...])
        # Gate kept as (B, C, 1): tiny, and keeps block shapes on the proven
        # full-dim layout (C full in the sublane slot, last dim == 1 == full).
        s_ref[...] = s[:, :, None].astype(s_ref.dtype)


def _se1d_reduce(x, w1, b1, w2, b2, *, tl, vmem_limit):
    B, C, L = x.shape
    H = w1.shape[1]
    n_l = pl.cdiv(L, tl)
    kernel = functools.partial(_se1d_reduce_kernel, l_total=L, tl=tl,
                               need_mask=(L % tl != 0))
    return pl.pallas_call(
        kernel,
        out_shape=jax.ShapeDtypeStruct((B, C, 1), jnp.float32),
        grid=(B, n_l),                                        # reduction axis last
        in_specs=[
            pl.BlockSpec((1, C, tl), lambda b, k: (b, 0, k)),
            pl.BlockSpec((C, H), lambda b, k: (0, 0)),
            pl.BlockSpec((1, H), lambda b, k: (0, 0)),
            pl.BlockSpec((H, C), lambda b, k: (0, 0)),
            pl.BlockSpec((1, C), lambda b, k: (0, 0)),
        ],
        out_specs=pl.BlockSpec((1, C, 1), lambda b, k: (b, 0, 0)),
        scratch_shapes=[pltpu.VMEM((1, C), jnp.float32)],
        compiler_params=pltpu.CompilerParams(
            dimension_semantics=("parallel", "arbitrary"),
            vmem_limit_bytes=int(vmem_limit),
        ),
    )(x, w1, b1, w2, b2)


def _se1d_scale_kernel(x_ref, s_ref, o_ref):
    x = x_ref[...]                                            # (1, C, TL)
    s = s_ref[...].astype(x.dtype)                            # (1, C, 1)
    o_ref[...] = (x * s).astype(o_ref.dtype)


def _se1d_scale(x, s, *, tl, vmem_limit):
    B, C, L = x.shape
    n_l = pl.cdiv(L, tl)
    return pl.pallas_call(
        _se1d_scale_kernel,
        out_shape=jax.ShapeDtypeStruct((B, C, L), x.dtype),
        grid=(B, n_l),
        in_specs=[
            pl.BlockSpec((1, C, tl), lambda b, k: (b, 0, k)),
            pl.BlockSpec((1, C, 1), lambda b, k: (b, 0, 0)),  # same gate, all tiles
        ],
        out_specs=pl.BlockSpec((1, C, tl), lambda b, k: (b, 0, k)),
        compiler_params=pltpu.CompilerParams(
            dimension_semantics=("parallel", "parallel"),
            vmem_limit_bytes=int(vmem_limit),
        ),
    )(x, s)


def _se1d_two_pass(x, w1, b1, w2, b2, *, tl=None, vmem_limit=None):
    B, C, L = x.shape
    if vmem_limit is None:
        vmem_limit, block_budget = _vmem_budgets()
    else:
        block_budget = max(vmem_limit - 8 * _MIB, 8 * _MIB)
    if tl is None:
        # Byte-sized L tile: largest multiple of 128 whose in+out,
        # double-buffered blocks fit the budget (beats a fixed 512).
        tl = _choose_tl(L, C, jnp.dtype(x.dtype).itemsize, block_budget)
    tl = min(int(tl), L)  # tl must be a multiple of 128 or equal to L
    s = _se1d_reduce(x, w1, b1, w2, b2, tl=tl, vmem_limit=vmem_limit)
    return _se1d_scale(x, s, tl=tl, vmem_limit=vmem_limit)


# ---------------------------------------------------------------------------
# Public entry point: pick the structure by per-batch VMEM footprint.
# ---------------------------------------------------------------------------
def se_layer_1d(x, w1, b1, w2, b2):
    """out = x * sigmoid(relu(mean_L(x) @ w1 + b1) @ w2 + b2)[:, :, None]."""
    B, C, L = x.shape
    itemsize = jnp.dtype(x.dtype).itemsize
    vmem_limit, block_budget = _vmem_budgets()
    per_sample = 4 * C * L * itemsize  # (in + out block) * 2 pipeline buffers
    if per_sample <= block_budget:
        # Batch as many samples per grid step as fit (largest divisor of B),
        # amortizing per-step pipeline overhead and widening the excite matmul.
        tb = _choose_tb(B, block_budget // per_sample)
        # TODO(synk): on v7x (2 TensorCores) a 1-step grid leaves a core idle;
        # split along L with a partial-sum finalize for B == 1 if that matters.
        return _se1d_fused(x, w1, b1, w2, b2, tb=tb, vmem_limit=vmem_limit)
    return _se1d_two_pass(x, w1, b1, w2, b2, vmem_limit=vmem_limit)


def se_layer_1d_ref(x, w1, b1, w2, b2):
    y = jnp.mean(x.astype(jnp.float32), axis=-1)
    h = jnp.maximum(y @ w1 + b1, 0.0)
    s = jax.nn.sigmoid(h @ w2 + b2)
    return (x * s[:, :, None].astype(x.dtype)).astype(x.dtype)


if __name__ == "__main__":
    key = jax.random.PRNGKey(0)
    k = jax.random.split(key, 10)

    # --- Test 1: fused single-pass path with multi-sample (TB > 1) blocks. ---
    B, C, L, r = 4, 8, 16, 4
    H = C // r
    x = jax.random.normal(k[0], (B, C, L), dtype=jnp.float32)
    w1 = jax.random.normal(k[1], (C, H), dtype=jnp.float32) * 0.1
    b1 = jax.random.normal(k[2], (1, H), dtype=jnp.float32) * 0.1
    w2 = jax.random.normal(k[3], (H, C), dtype=jnp.float32) * 0.1
    b2 = jax.random.normal(k[4], (1, C), dtype=jnp.float32) * 0.1

    out = jax.block_until_ready(se_layer_1d(x, w1, b1, w2, b2))
    ref = se_layer_1d_ref(x, w1, b1, w2, b2)
    np.testing.assert_allclose(np.asarray(out), np.asarray(ref), rtol=1e-5, atol=1e-5)

    # --- Test 2: two-pass path with a partial (masked) last L tile. ----------
    B2, C2, L2, H2, TL2 = 2, 16, 320, 4, 128
    x2 = jax.random.normal(k[5], (B2, C2, L2), dtype=jnp.float32)
    w1b = jax.random.normal(k[6], (C2, H2), dtype=jnp.float32) * 0.1
    b1b = jax.random.normal(k[7], (1, H2), dtype=jnp.float32) * 0.1
    w2b = jax.random.normal(k[8], (H2, C2), dtype=jnp.float32) * 0.1
    b2b = jax.random.normal(k[9], (1, C2), dtype=jnp.float32) * 0.1

    out2 = jax.block_until_ready(
        _se1d_two_pass(x2, w1b, b1b, w2b, b2b, tl=TL2))
    ref2 = se_layer_1d_ref(x2, w1b, b1b, w2b, b2b)
    np.testing.assert_allclose(np.asarray(out2), np.asarray(ref2), rtol=1e-5, atol=1e-5)

    # --- Test 3: two-pass path with aligned L (mask statically elided). ------
    L3 = 256
    x3 = jax.random.normal(k[5], (B2, C2, L3), dtype=jnp.float32)
    out3 = jax.block_until_ready(
        _se1d_two_pass(x3, w1b, b1b, w2b, b2b, tl=128))
    ref3 = se_layer_1d_ref(x3, w1b, b1b, w2b, b2b)
    np.testing.assert_allclose(np.asarray(out3), np.asarray(ref3), rtol=1e-5, atol=1e-5)

    print("KERNEL_OK")
</pallas_src>

<mosaic_0001>
module attributes {stable_mosaic.version = 11 : i64} {
  func.func @_se1d_fused_kernel(%arg0: i32, %arg1: memref<4x8x16xf32, #tpu.memory_space<vmem>>, %arg2: memref<8x2xf32, #tpu.memory_space<vmem>>, %arg3: memref<1x2xf32, #tpu.memory_space<vmem>>, %arg4: memref<2x8xf32, #tpu.memory_space<vmem>>, %arg5: memref<1x8xf32, #tpu.memory_space<vmem>>, %arg6: memref<4x8x16xf32, #tpu.memory_space<vmem>>) attributes {dimension_semantics = [#tpu.dimension_semantics<parallel>], iteration_bounds = array<i64: 1>, scalar_prefetch = 0 : i64, scratch_operands = 0 : i64, tpu.core_type = #tpu.core_type<tc>, window_params = [{transform_indices = @transform_0, window_bounds = array<i64: 4, 8, 16>}, {pipeline_mode = #tpu.pipeline_mode<synchronous>, transform_indices = @transform_1, window_bounds = array<i64: 8, 2>}, {pipeline_mode = #tpu.pipeline_mode<synchronous>, transform_indices = @transform_2, window_bounds = array<i64: 1, 2>}, {pipeline_mode = #tpu.pipeline_mode<synchronous>, transform_indices = @transform_3, window_bounds = array<i64: 2, 8>}, {pipeline_mode = #tpu.pipeline_mode<synchronous>, transform_indices = @transform_4, window_bounds = array<i64: 1, 8>}, {transform_indices = @transform_5, window_bounds = array<i64: 4, 8, 16>}]} {
    %c0 = arith.constant 0 : index
    %c0_0 = arith.constant 0 : index
    %c0_1 = arith.constant 0 : index
    %0 = vector.load %arg1[%c0, %c0_0, %c0_1] : memref<4x8x16xf32, #tpu.memory_space<vmem>>, vector<4x8x16xf32>
    %cst = arith.constant dense<0.000000e+00> : vector<4x8xf32>
    %1 = vector.multi_reduction <add>, %0, %cst [2] : vector<4x8x16xf32> to vector<4x8xf32>
    %cst_2 = arith.constant 6.250000e-02 : f32
    %2 = vector.broadcast %cst_2 : f32 to vector<4x8xf32>
    %3 = arith.mulf %1, %2 : vector<4x8xf32>
    %c0_3 = arith.constant 0 : index
    %c0_4 = arith.constant 0 : index
    %4 = vector.load %arg2[%c0_3, %c0_4] : memref<8x2xf32, #tpu.memory_space<vmem>>, vector<8x2xf32>
    %cst_5 = arith.constant dense<0.000000e+00> : vector<4x2xf32>
    %5 = tpu.matmul %3, %4, %cst_5 {dimension_numbers = #tpu.dot_dimension_numbers<[1], [0], [0], [1], [0, 0, 1, 1], [], []>} : vector<4x8xf32>, vector<8x2xf32>, vector<4x2xf32> -> vector<4x2xf32>
    %c0_6 = arith.constant 0 : index
    %c0_7 = arith.constant 0 : index
    %6 = vector.load %arg3[%c0_6, %c0_7] : memref<1x2xf32, #tpu.memory_space<vmem>>, vector<1x2xf32>
    %7 = vector.broadcast %6 : vector<1x2xf32> to vector<4x2xf32>
    %8 = arith.addf %5, %7 : vector<4x2xf32>
    %cst_8 = arith.constant 0.000000e+00 : f32
    %9 = vector.broadcast %cst_8 : f32 to vector<4x2xf32>
    %10 = arith.maximumf %8, %9 : vector<4x2xf32>
    %c0_9 = arith.constant 0 : index
    %c0_10 = arith.constant 0 : index
    %11 = vector.load %arg4[%c0_9, %c0_10] : memref<2x8xf32, #tpu.memory_space<vmem>>, vector<2x8xf32>
    %cst_11 = arith.constant dense<0.000000e+00> : vector<4x8xf32>
    %12 = tpu.matmul %10, %11, %cst_11 {dimension_numbers = #tpu.dot_dimension_numbers<[1], [0], [0], [1], [0, 0, 1, 1], [], []>} : vector<4x2xf32>, vector<2x8xf32>, vector<4x8xf32> -> vector<4x8xf32>
    %c0_12 = arith.constant 0 : index
    %c0_13 = arith.constant 0 : index
    %13 = vector.load %arg5[%c0_12, %c0_13] : memref<1x8xf32, #tpu.memory_space<vmem>>, vector<1x8xf32>
    %14 = vector.broadcast %13 : vector<1x8xf32> to vector<4x8xf32>
    %15 = arith.addf %12, %14 : vector<4x8xf32>
    %16 = arith.negf %15 : vector<4x8xf32>
    %17 = math.exp %16 : vector<4x8xf32>
    %cst_14 = arith.constant 1.000000e+00 : f32
    %18 = vector.broadcast %cst_14 : f32 to vector<4x8xf32>
    %19 = arith.addf %18, %17 : vector<4x8xf32>
    %20 = arith.divf %18, %19 : vector<4x8xf32>
    %c0_15 = arith.constant 0 : index
    %c0_16 = arith.constant 0 : index
    %c0_17 = arith.constant 0 : index
    %21 = vector.load %arg1[%c0_15, %c0_16, %c0_17] : memref<4x8x16xf32, #tpu.memory_space<vmem>>, vector<4x8x16xf32>
    %22 = vector.shape_cast %20 : vector<4x8xf32> to vector<4x8x1xf32>
    %23 = vector.broadcast %22 : vector<4x8x1xf32> to vector<4x8x16xf32>
    %24 = arith.mulf %21, %23 : vector<4x8x16xf32>
    %c0_18 = arith.constant 0 : index
    %c0_19 = arith.constant 0 : index
    %c0_20 = arith.constant 0 : index
    %25 = vector.load %arg6[%c0_18, %c0_19, %c0_20] : memref<4x8x16xf32, #tpu.memory_space<vmem>>, vector<4x8x16xf32>
    tpu.vector_store %arg6[%c0_18, %c0_19, %c0_20], %24 {strides = array<i32>} : memref<4x8x16xf32, #tpu.memory_space<vmem>>, vector<4x8x16xf32>,
    return
  }
  func.func @transform_0(%arg0: i32) -> (i32, i32, i32) {
    %c0_i32 = arith.constant 0 : i32
    %c0_i32_0 = arith.constant 0 : i32
    %c0_i32_1 = arith.constant 0 : i32
    return %arg0, %c0_i32, %c0_i32_0 : i32, i32, i32
  }
  func.func @transform_1(%arg0: i32) -> (i32, i32) {
    %c0_i32 = arith.constant 0 : i32
    %c0_i32_0 = arith.constant 0 : i32
    %c0_i32_1 = arith.constant 0 : i32
    return %c0_i32, %c0_i32_0 : i32, i32
  }
  func.func @transform_2(%arg0: i32) -> (i32, i32) {
    %c0_i32 = arith.constant 0 : i32
    %c0_i32_0 = arith.constant 0 : i32
    %c0_i32_1 = arith.constant 0 : i32
    return %c0_i32, %c0_i32_0 : i32, i32
  }
  func.func @transform_3(%arg0: i32) -> (i32, i32) {
    %c0_i32 = arith.constant 0 : i32
    %c0_i32_0 = arith.constant 0 : i32
    %c0_i32_1 = arith.constant 0 : i32
    return %c0_i32, %c0_i32_0 : i32, i32
  }
  func.func @transform_4(%arg0: i32) -> (i32, i32) {
    %c0_i32 = arith.constant 0 : i32
    %c0_i32_0 = arith.constant 0 : i32
    %c0_i32_1 = arith.constant 0 : i32
    return %c0_i32, %c0_i32_0 : i32, i32
  }
  func.func @transform_5(%arg0: i32) -> (i32, i32, i32) {
    %c0_i32 = arith.constant 0 : i32
    %c0_i32_0 = arith.constant 0 : i32
    %c0_i32_1 = arith.constant 0 : i32
    return %arg0, %c0_i32, %c0_i32_0 : i32, i32, i32
  }
}

</mosaic_0001>

<llo_original>
// kernel: tpu_custom_call.1
$region0: #{tpu_custom_call.1}
  #allocation0 [shape = 'u32[]', space=smem, size = 0x4, offset = 0x4, fixed_abs, tag = 'smem constant byte address 0x4 - core index']
  #allocation1 [shape = 'u32[144,128]{1,0:T(1,128)}', space=vmem, size = 0x12000, scoped, tag = 'internal scratch']
  %s0 = inlined_call_operand.hbm [shape: f32[4,8,16], index: 0, kind: input, shape index: {}]
  %s1 = inlined_call_operand.vmem [shape: f32[8,2], index: 1, kind: input, shape index: {}]
  %s2 = inlined_call_operand.vmem [shape: f32[1,2], index: 2, kind: input, shape index: {}]
  %s3 = inlined_call_operand.vmem [shape: f32[2,8], index: 3, kind: input, shape index: {}]
  %s4 = inlined_call_operand.vmem [shape: f32[1,8], index: 4, kind: input, shape index: {}]
  %s5 = inlined_call_operand.hbm [shape: f32[4,8,16], index: 5, kind: output, shape index: {}]
  %s6 = sld [smem:[#allocation0]]
  $region34: #{tpu_custom_call.1} parent=0
    _
  %s8 = ssub.s32 1, %s6
  %s9 = scalar_select 0, %s8, %s6
  $region1: #{tpu_custom_call.1} parent=0
    #allocation2 [shape = 'u8[16384]{0}', space=vmem, size = 0x4000, scoped, tag = 'input window, operand 0, single buffered']
    #allocation3 [shape = 's32[1]{0}', space=sflag, size = 0x4, scoped, tag = 'scoped memory for tpu_custom_call.1']
    #allocation4 [shape = 's32[1]{0}', space=sflag, size = 0x4, scoped, tag = 'scoped memory for tpu_custom_call.1']
    #allocation5 [shape = 'u8[16384]{0}', space=vmem, size = 0x4000, scoped, tag = 'output window, operand 0, single buffered']
    %10 = vsyncpa [#allocation3], 0
    %11 = vsyncpa [#allocation4], 0
    // Predicated region
    $region2: #{tpu_custom_call.1} parent=1 // pred_check
      _
    $region3: #{tpu_custom_call.1} parent=1 // pred_check_branch
      %13 = sbr.rel (0) target = $region5
    $region4: #{tpu_custom_call.1} parent=1 // pred_region
      %s15 = ssub.s32 512, 512
      %16 = vsyncadd [#allocation3], %s15
      %s17 = sshll.u32 [#allocation2], 4
      %s18 = int_to_ptr.vmem [resolvable:$true] %s17
      %23 = dma.hbm_to_vmem [thread:$0]  %s0, 512, %s18, [#allocation3], 128, 128, 8
    $region5: #{tpu_custom_call.1} parent=1 // pred_fallthru
      _
    // Predicated region
    $region6: #{tpu_custom_call.1} parent=1 // pred_check
      _
    $region7: #{tpu_custom_call.1} parent=1 // pred_check_branch
      %25 = sbr.rel (0) target = $region9
    $region8: #{tpu_custom_call.1} parent=1 // pred_region
      _
    $region9: #{tpu_custom_call.1} parent=1 // pred_fallthru
      _
    // Predicated region
    $region10: #{tpu_custom_call.1} parent=1 // pred_check
      _
    $region11: #{tpu_custom_call.1} parent=1 // pred_check_branch
      %27 = sbr.rel (0) target = $region13
    $region12: #{tpu_custom_call.1} parent=1 // pred_region
      _
    $region13: #{tpu_custom_call.1} parent=1 // pred_fallthru
      _
    // Predicated region
    $region14: #{tpu_custom_call.1} parent=1 // pred_check
      _
    $region15: #{tpu_custom_call.1} parent=1 // pred_check_branch
      %29 = sbr.rel (0) target = $region17
    $region16: #{tpu_custom_call.1} parent=1 // pred_region
      _
    $region17: #{tpu_custom_call.1} parent=1 // pred_fallthru
      _
    // Predicated region
    $region18: #{tpu_custom_call.1} parent=1 // pred_check
      _
    $region19: #{tpu_custom_call.1} parent=1 // pred_check_branch
      %31 = sbr.rel (0) target = $region21
    $region20: #{tpu_custom_call.1} parent=1 // pred_region
      _
    $region21: #{tpu_custom_call.1} parent=1 // pred_fallthru
      _
    // Predicated region
    $region22: #{tpu_custom_call.1} parent=1 // pred_check
      _
    $region23: #{tpu_custom_call.1} parent=1 // pred_check_branch
      %33 = sbr.rel (0) target = $region25
    $region24: #{tpu_custom_call.1} parent=1 // pred_region
      %34 = dma.done [#allocation3], 512
    $region25: #{tpu_custom_call.1} parent=1 // pred_fallthru
      _
    %v35 = vld [vmem:[#allocation2] sm:$0xff]
    %v36 = vld [vmem:[#allocation2 + $0x8] sm:$0xff]
    %v37 = vld [vmem:[#allocation2 + $0x10] sm:$0xff]
    %v38 = vld [vmem:[#allocation2 + $0x18] sm:$0xff]
    %vm39 = vcmask 130048
    %v40 = vsel %vm39, %v35, 0.0
    %41 = vadd.xlane.f32.xlu0 %v40
    %v42 = vpop.xlane.xlu0 %41
    %v43 = vsel %vm39, %v36, 0.0
    %44 = vadd.xlane.f32.xlu0 %v43
    %v45 = vpop.xlane.xlu0 %44
    %v46 = vsel %vm39, %v37, 0.0
    %47 = vadd.xlane.f32.xlu0 %v46
    %v48 = vpop.xlane.xlu0 %47
    %v49 = vsel %vm39, %v38, 0.0
    %50 = vadd.xlane.f32.xlu0 %v49
    %v51 = vpop.xlane.xlu0 %50
    %v52 = vmul.f32 %v42, 0.0625
    %v53 = vmul.f32 %v45, 0.0625
    %v54 = vmul.f32 %v48, 0.0625
    %v55 = vmul.f32 %v51, 0.0625
    %v56 = vld [vmem:[%s1] sm:$0xff]
    %v57 = vld [vmem:[%s2] sm:$0x1]
    %v59 = vlaneseq
    %v60 = vshrl.u32 %v59, 7
    %v61 = vsub.s32 0, %v60
    %v62 = vrot.slane %v57, %v61
    %v68 = vlaneseq
    %v69 = vand.u32 %v68, 127
    %v70 = vlaneseq
    %v71 = vshrl.u32 %v70, 7
    %v72 = vsub.s32 %v69, %v71
    %v73 = vrot.slane %v52, %v72
    %v74 = vlaneseq
    %v75 = vshrl.u32 %v74, 7
    %v76 = vsub.s32 %v69, %v75
    %v77 = vrot.slane %v53, %v76
    %v78 = vlaneseq
    %v79 = vshrl.u32 %v78, 7
    %v80 = vsub.s32 %v69, %v79
    %v81 = vrot.slane %v54, %v80
    %v82 = vlaneseq
    %v83 = vshrl.u32 %v82, 7
    %v84 = vsub.s32 %v69, %v83
    %v85 = vrot.slane %v55, %v84
    %vm86 = vcmask 1041409
    %v87 = vsel %vm86, %v77, %v73
    %vm88 = vcmask 1042434
    %v89 = vsel %vm88, %v81, %v87
    %vm90 = vcmask 1043459
    %v91 = vsel %vm90, %v85, %v89
    %vm92 = vcmask 64512
    %v93 = vsel %vm92, %v91, 0
    %95 = vmatprep.subr.mxu0 0.0
    %96 = vmatpush1.msra.mxu0 0.0
    %97 = vmatprep.subr.mxu0 0.0
    %98 = vmatpush1.msra.mxu0 0.0
    %99 = vmatprep.subr.mxu0 0.0
    %100 = vmatpush1.msra.mxu0 0.0
    %101 = vmatprep.subr.mxu0 0.0
    %102 = vmatpush1.msra.mxu0 0.0
    %103 = vmatprep.subr.mxu0 0.0
    %104 = vmatpush1.msra.mxu0 0.0
    %105 = vmatprep.subr.mxu0 0.0
    %106 = vmatpush1.msra.mxu0 0.0
    %107 = vmatprep.subr.mxu0 0.0
    %108 = vmatpush1.msra.mxu0 0.0
    %109 = vmatprep.subr.mxu0 0.0
    %110 = vmatpush1.msra.mxu0 0.0
    %111 = vmatprep.subr.mxu0 0.0
    %112 = vmatpush1.msra.mxu0 0.0
    %113 = vmatprep.subr.mxu0 0.0
    %114 = vmatpush1.msra.mxu0 0.0
    %115 = vmatprep.subr.mxu0 0.0
    %116 = vmatpush1.msra.mxu0 0.0
    %117 = vmatprep.subr.mxu0 0.0
    %118 = vmatpush1.msra.mxu0 0.0
    %119 = vmatprep.subr.mxu0 0.0
    %120 = vmatpush1.msra.mxu0 0.0
    %121 = vmatprep.subr.mxu0 0.0
    %122 = vmatpush1.msra.mxu0 0.0
    %123 = vmatprep.subr.mxu0 0.0
    %124 = vmatpush1.msra.mxu0 0.0
    %125 = vmatprep.subr.mxu0 0.0
    %126 = vmatpush1.msra.mxu0 %v56
    %127 = vmatprep.subr.mxu0 0.0
    %128 = vmatpush2.msra.mxu0 0.0
    %129 = vmatprep.subr.mxu0 0.0
    %130 = vmatpush2.msra.mxu0 0.0
    %131 = vmatprep.subr.mxu0 0.0
    %132 = vmatpush2.msra.mxu0 0.0
    %133 = vmatprep.subr.mxu0 0.0
    %134 = vmatpush2.msra.mxu0 0.0
    %135 = vmatprep.subr.mxu0 0.0
    %136 = vmatpush2.msra.mxu0 0.0
    %137 = vmatprep.subr.mxu0 0.0
    %138 = vmatpush2.msra.mxu0 0.0
    %139 = vmatprep.subr.mxu0 0.0
    %140 = vmatpush2.msra.mxu0 0.0
    %141 = vmatprep.subr.mxu0 0.0
    %142 = vmatpush2.msra.mxu0 0.0
    %143 = vmatprep.subr.mxu0 0.0
    %144 = vmatpush2.msra.mxu0 0.0
    %145 = vmatprep.subr.mxu0 0.0
    %146 = vmatpush2.msra.mxu0 0.0
    %147 = vmatprep.subr.mxu0 0.0
    %148 = vmatpush2.msra.mxu0 0.0
    %149 = vmatprep.subr.mxu0 0.0
    %150 = vmatpush2.msra.mxu0 0.0
    %151 = vmatprep.subr.mxu0 0.0
    %152 = vmatpush2.msra.mxu0 0.0
    %153 = vmatprep.subr.mxu0 0.0
    %154 = vmatpush2.msra.mxu0 0.0
    %155 = vmatprep.subr.mxu0 0.0
    %156 = vmatpush2.msra.mxu0 0.0
    %157 = vmatprep.subr.mxu0 0.0
    %158 = vmatpush2.msra.mxu0 0.0
    %159 = vmatprep.mubr.f32.mxu0 0.0
    %160 = vmatmul.mubr.f32.gmra.mxu0 %v93
    %v161 = vpop.f32.mrf.mxu0
    %v162 = vadd.f32 %v62, %v161
    %v163 = vpop.f32.mrf.mxu0
    %164 = vdwg.mxu0
    %v165 = vmax.f32 %v162, 0.0
    %v166 = vld [vmem:[%s3] sm:$0x3]
    %v167 = vld [vmem:[%s4] sm:$0x1]
    %v169 = vlaneseq
    %v170 = vshrl.u32 %v169, 7
    %v171 = vsub.s32 0, %v170
    %v172 = vrot.slane %v167, %v171
    %vm174 = vcmask 15360
    %v176 = vsel %vm174, %v165, 0
    %vm178 = vcmask 1041408
    %v180 = vsel %vm178, %v166, 0
    %182 = vmatprep.subr.mxu0 0.0
    %183 = vmatpush1.msra.mxu0 0.0
    %184 = vmatprep.subr.mxu0 0.0
    %185 = vmatpush1.msra.mxu0 0.0
    %186 = vmatprep.subr.mxu0 0.0
    %187 = vmatpush1.msra.mxu0 0.0
    %188 = vmatprep.subr.mxu0 0.0
    %189 = vmatpush1.msra.mxu0 0.0
    %190 = vmatprep.subr.mxu0 0.0
    %191 = vmatpush1.msra.mxu0 0.0
    %192 = vmatprep.subr.mxu0 0.0
    %193 = vmatpush1.msra.mxu0 0.0
    %194 = vmatprep.subr.mxu0 0.0
    %195 = vmatpush1.msra.mxu0 0.0
    %196 = vmatprep.subr.mxu0 0.0
    %197 = vmatpush1.msra.mxu0 0.0
    %198 = vmatprep.subr.mxu0 0.0
    %199 = vmatpush1.msra.mxu0 0.0
    %200 = vmatprep.subr.mxu0 0.0
    %201 = vmatpush1.msra.mxu0 0.0
    %202 = vmatprep.subr.mxu0 0.0
    %203 = vmatpush1.msra.mxu0 0.0
    %204 = vmatprep.subr.mxu0 0.0
    %205 = vmatpush1.msra.mxu0 0.0
    %206 = vmatprep.subr.mxu0 0.0
    %207 = vmatpush1.msra.mxu0 0.0
    %208 = vmatprep.subr.mxu0 0.0
    %209 = vmatpush1.msra.mxu0 0.0
    %210 = vmatprep.subr.mxu0 0.0
    %211 = vmatpush1.msra.mxu0 0.0
    %212 = vmatprep.subr.mxu0 0.0
    %213 = vmatpush1.msra.mxu0 %v180
    %214 = vmatprep.subr.mxu0 0.0
    %215 = vmatpush2.msra.mxu0 0.0
    %216 = vmatprep.subr.mxu0 0.0
    %217 = vmatpush2.msra.mxu0 0.0
    %218 = vmatprep.subr.mxu0 0.0
    %219 = vmatpush2.msra.mxu0 0.0
    %220 = vmatprep.subr.mxu0 0.0
    %221 = vmatpush2.msra.mxu0 0.0
    %222 = vmatprep.subr.mxu0 0.0
    %223 = vmatpush2.msra.mxu0 0.0
    %224 = vmatprep.subr.mxu0 0.0
    %225 = vmatpush2.msra.mxu0 0.0
    %226 = vmatprep.subr.mxu0 0.0
    %227 = vmatpush2.msra.mxu0 0.0
    %228 = vmatprep.subr.mxu0 0.0
    %229 = vmatpush2.msra.mxu0 0.0
    %230 = vmatprep.subr.mxu0 0.0
    %231 = vmatpush2.msra.mxu0 0.0
    %232 = vmatprep.subr.mxu0 0.0
    %233 = vmatpush2.msra.mxu0 0.0
    %234 = vmatprep.subr.mxu0 0.0
    %235 = vmatpush2.msra.mxu0 0.0
    %236 = vmatprep.subr.mxu0 0.0
    %237 = vmatpush2.msra.mxu0 0.0
    %238 = vmatprep.subr.mxu0 0.0
    %239 = vmatpush2.msra.mxu0 0.0
    %240 = vmatprep.subr.mxu0 0.0
    %241 = vmatpush2.msra.mxu0 0.0
    %242 = vmatprep.subr.mxu0 0.0
    %243 = vmatpush2.msra.mxu0 0.0
    %244 = vmatprep.subr.mxu0 0.0
    %245 = vmatpush2.msra.mxu0 0.0
    %246 = vmatprep.mubr.f32.mxu0 0.0
    %247 = vmatmul.mubr.f32.gmra.mxu0 %v176
    %v248 = vpop.f32.mrf.mxu0
    %v249 = vadd.f32 %v172, %v248
    %v250 = vpop.f32.mrf.mxu0
    %251 = vdwg.mxu0
    %v252 = vxor.u32 %v249, 2147483648
    %v253 = vmul.f32 %v252, 1.442695
    %v254 = vpow.pop %v253
    %v255 = vadd.f32 %v254, 1.0
    %v256 = vrcp.pop %v255
    %v257 = vmul.f32 1.0, %v256
    %v258 = vlaneseq
    %v259 = vshrl.u32 %v258, 7
    %v260 = vsub.s32 0, %v259
    %v261 = vrot.slane %v257, %v260
    %263 = vbcast.lane.b32.xlu0 %v261, 256
    %v264 = vpop.permute.xlu0 %263
    %v265 = vlaneseq
    %v266 = vshrl.u32 %v265, 7
    %v267 = vsub.s32 1, %v266
    %v268 = vrot.slane %v257, %v267
    %270 = vbcast.lane.b32.xlu0 %v268, 256
    %v271 = vpop.permute.xlu0 %270
    %v272 = vlaneseq
    %v273 = vshrl.u32 %v272, 7
    %v274 = vsub.s32 2, %v273
    %v275 = vrot.slane %v257, %v274
    %277 = vbcast.lane.b32.xlu0 %v275, 256
    %v278 = vpop.permute.xlu0 %277
    %v279 = vlaneseq
    %v280 = vshrl.u32 %v279, 7
    %v281 = vsub.s32 3, %v280
    %v282 = vrot.slane %v257, %v281
    %284 = vbcast.lane.b32.xlu0 %v282, 256
    %v285 = vpop.permute.xlu0 %284
    %v286 = vmul.f32 %v35, %v264
    %v287 = vmul.f32 %v36, %v271
    %v288 = vmul.f32 %v37, %v278
    %v289 = vmul.f32 %v38, %v285
    %290 = vst.msk [vmem:[#allocation5] sm:$0xff] %vm39, %v286
    %291 = vst.msk [vmem:[#allocation5 + $0x8] sm:$0xff] %vm39, %v287
    %292 = vst.msk [vmem:[#allocation5 + $0x10] sm:$0xff] %vm39, %v288
    %293 = vst.msk [vmem:[#allocation5 + $0x18] sm:$0xff] %vm39, %v289
    // Predicated region
    $region26: #{tpu_custom_call.1} parent=1 // pred_check
      _
    $region27: #{tpu_custom_call.1} parent=1 // pred_check_branch
      %295 = sbr.rel (0) target = $region29
    $region28: #{tpu_custom_call.1} parent=1 // pred_region
      %s297 = ssub.s32 512, 512
      %298 = vsyncadd [#allocation4], %s297
      %s299 = sshll.u32 [#allocation5], 4
      %s300 = int_to_ptr.vmem [resolvable:$true] %s299
      %305 = dma.vmem_to_hbm [thread:$0]  %s300, 512, %s5, [#allocation4], 128, 128, 8
    $region29: #{tpu_custom_call.1} parent=1 // pred_fallthru
      _
    // Predicated region
    $region30: #{tpu_custom_call.1} parent=1 // pred_check
      _
    $region31: #{tpu_custom_call.1} parent=1 // pred_check_branch
      %307 = sbr.rel (0) target = $region33
    $region32: #{tpu_custom_call.1} parent=1 // pred_region
      %308 = dma.done [#allocation4], 512
    $region33: #{tpu_custom_call.1} parent=1 // pred_fallthru
      _
    %309 = vsyncpa [#allocation3], 1
    %310 = vsyncpa [#allocation4], 1

</llo_original>
